<compile_context>
chip_gen: v6e
topology: v6e:2x2x1
jax: 0.10.0
libtpu: 0.0.40
codegen_flags: <defaults>
</compile_context>

<pallas_src>
import math

import jax
import jax.numpy as jnp
import numpy as np
from jax import lax
from jax.experimental import pallas as pl
from jax.experimental.pallas import tpu as pltpu


# --------------------------------------------------------------------------- #
# Kernel 1: batched input projection for both directions (bf16 MXU matmul).    #
# --------------------------------------------------------------------------- #
def _input_proj_kernel(x_ref, w_ref, b_ref, g_ref):
    # x_ref: (M_tile, E) bf16   w_ref: (E, TN) bf16   b_ref: (1, TN) f32
    # g_ref: (M_tile, TN) bf16  -- accumulate in f32, add f32 bias, store bf16.
    acc = jnp.dot(x_ref[...], w_ref[...], preferred_element_type=jnp.float32)
    g_ref[...] = (acc + b_ref[...]).astype(g_ref.dtype)


# --------------------------------------------------------------------------- #
# Kernel 2: time-chunked, direction-interleaved bi-LSTM recurrence.            #
# --------------------------------------------------------------------------- #
def _bilstm_recurrence_kernel(lens_ref, gf_ref, gb_ref, whh_f_ref, whh_b_ref,
                              hidden_ref, cell_ref,
                              hf_ref, cf_ref, hb_ref, cb_ref):
    T = gf_ref.shape[0]                    # timesteps per chunk
    B, H = hf_ref.shape                    # batch shard, hidden

    i = pl.program_id(1)                   # time-chunk axis ("arbitrary")
    n_chunks = pl.num_programs(1)

    @pl.when(i == 0)
    def _init():
        z = jnp.zeros((B, H), jnp.float32)
        hf_ref[...] = z
        cf_ref[...] = z
        hb_ref[...] = z
        cb_ref[...] = z

    # Hoisted out of the per-timestep loop: lengths, recurrent weights (bf16).
    lens = lens_ref[...]                   # (B, 1) int32
    whh_f = whh_f_ref[...]                 # (H, 4H) bf16, i/f/o cols pre-scaled by 0.5
    whh_b = whh_b_ref[...]                 # (H, 4H) bf16

    t0_f = i * T                           # first global timestep of the fwd chunk
    t0_b = (n_chunks - 1 - i) * T          # first global timestep of the bwd chunk

    def gate_update(pre, h, c, t_glob):
        # pre: (B, 4H) f32 pre-activations; i/f/o columns already scaled by 0.5, so
        # sigmoid(z) = 0.5 * tanh(z/2) + 0.5 takes a single full-slab tanh (EUP).
        t_all = jnp.tanh(pre)
        i_g = 0.5 * t_all[:, 0 * H:1 * H] + 0.5
        f_g = 0.5 * t_all[:, 1 * H:2 * H] + 0.5
        g_g = t_all[:, 2 * H:3 * H]
        o_g = 0.5 * t_all[:, 3 * H:4 * H] + 0.5
        c_new = f_g * c + i_g * g_g
        h_new = o_g * jnp.tanh(c_new)
        m = t_glob < lens                  # (B, 1) packed-sequence validity mask
        return jnp.where(m, h_new, h), jnp.where(m, c_new, c)

    def step(s, carry):
        h_f, c_f, h_b, c_b = carry
        # Forward chain: local row s, global time t0_f + s (4H-wide fwd gate block).
        pre_f = gf_ref[s].astype(jnp.float32) + jnp.dot(
            h_f.astype(whh_f.dtype), whh_f, preferred_element_type=jnp.float32)
        # Backward chain: local row T-1-s, global time t0_b + T-1-s (bwd gate block).
        pre_b = gb_ref[T - 1 - s].astype(jnp.float32) + jnp.dot(
            h_b.astype(whh_b.dtype), whh_b, preferred_element_type=jnp.float32)
        # The two chains are independent; interleaving hides each other's latency.
        h_f, c_f = gate_update(pre_f, h_f, c_f, t0_f + s)
        h_b, c_b = gate_update(pre_b, h_b, c_b, t0_b + (T - 1 - s))
        return h_f, c_f, h_b, c_b

    carry0 = (hf_ref[...], cf_ref[...], hb_ref[...], cb_ref[...])
    # unroll=2 (not full): (B,4H) f32 gate slabs already eat most of the vreg file
    # at production H; full unroll of T steps would force spills onto the vld/vst slots.
    h_f, c_f, h_b, c_b = lax.fori_loop(0, T, step, carry0, unroll=2)

    hf_ref[...] = h_f
    cf_ref[...] = c_f
    hb_ref[...] = h_b
    cb_ref[...] = c_b

    # Output block index is constant across the chunk axis -> resident accumulator;
    # write it only on the last chunk (saves redundant vector stores per chunk).
    @pl.when(i == n_chunks - 1)
    def _finalize():
        hidden_ref[0] = h_f
        hidden_ref[1] = h_b
        cell_ref[0] = c_f
        cell_ref[1] = c_b


# --------------------------------------------------------------------------- #
# Parameter prep: fold the sigmoid-as-tanh 1/2 scale into i/f/o gate columns,  #
# concatenate both directions' input weights/biases, cast matmul operands bf16.#
# --------------------------------------------------------------------------- #
def _prepare_kernel_params(params, matmul_dtype=jnp.bfloat16):
    H = params["whh_f"].shape[0]
    col_scale = jnp.concatenate(
        [jnp.full((H,), 0.5, jnp.float32),   # i
         jnp.full((H,), 0.5, jnp.float32),   # f
         jnp.ones((H,), jnp.float32),        # g (tanh gate, unscaled)
         jnp.full((H,), 0.5, jnp.float32)],  # o
        axis=0)                              # (4H,)

    def scale(w):
        return w.astype(jnp.float32) * col_scale

    wih_cat = jnp.concatenate(
        [scale(params["wih_f"]), scale(params["wih_b"])], axis=1).astype(matmul_dtype)   # (E, 8H)
    b_cat = jnp.concatenate(
        [scale(params["b_f"]), scale(params["b_b"])], axis=1).astype(jnp.float32)        # (1, 8H) f32
    whh_f = scale(params["whh_f"]).astype(matmul_dtype)                                  # (H, 4H)
    whh_b = scale(params["whh_b"]).astype(matmul_dtype)
    return wih_cat, b_cat, whh_f, whh_b


def encoder_forward(params, tokens, input_lens, *, chunk_t=8,
                    matmul_dtype=jnp.bfloat16):
    """tokens: (B, S) int32, input_lens: (B,) int32 (sorted descending).
    Returns (hidden, cell), each (2, B, H) — matches PyTorch bi-LSTM (h_n, c_n)."""
    B, S = tokens.shape
    E = params["embedding"].shape[1]
    H = params["whh_f"].shape[0]

    # ---- XLA glue: embedding gather, time-major layout, padding. ----
    x = jnp.take(params["embedding"], tokens, axis=0).astype(jnp.float32)  # (B, S, E)
    x = jnp.transpose(x, (1, 0, 2))                                        # (S, B, E)

    # Sublane packing: 16 rows for bf16 blocks, 8 for f32.
    sub = 16 if matmul_dtype == jnp.bfloat16 else 8
    B_pad = max(sub, ((B + sub - 1) // sub) * sub)

    T = chunk_t
    # Kernel-1 row tile decoupled from chunk_t: aim for ~512 rows per block so
    # per-grid-step overhead / tiny DMAs don't dominate; t1 is a multiple of T
    # so one S_pad works for both kernels.
    t1 = max(T, -(-512 // B_pad))
    t1 = ((t1 + T - 1) // T) * T
    S_pad = ((S + t1 - 1) // t1) * t1
    num_chunks = S_pad // T
    num_row_blocks = S_pad // t1
    m_tile = t1 * B_pad

    pad_s, pad_b = S_pad - S, B_pad - B
    if pad_s or pad_b:
        x = jnp.pad(x, ((0, pad_s), (0, pad_b), (0, 0)))
    lens2d = jnp.pad(input_lens.astype(jnp.int32), (0, pad_b)).reshape(B_pad, 1)

    wih_cat, b_cat, whh_f, whh_b = _prepare_kernel_params(params, matmul_dtype)
    x_flat = x.reshape(S_pad * B_pad, E).astype(matmul_dtype)

    # N-tile the 8H axis of kernel 1 so weight/output blocks stay <= a few MiB
    # (v7x VMEM headroom); fall back to the full width when it doesn't divide.
    tn = math.gcd(8 * H, 2048)
    if tn < 128:
        tn = 8 * H
    num_n_blocks = (8 * H) // tn

    vmem_limit = 64 * 1024 * 1024  # raised from 32 MiB; safe on v5e/v6e/v7x

    # ---- Kernel 1: hoisted input projection (row x N tiled, bf16 MXU). ----
    g_flat = pl.pallas_call(
        _input_proj_kernel,
        out_shape=jax.ShapeDtypeStruct((S_pad * B_pad, 8 * H), matmul_dtype),
        grid_spec=pltpu.PrefetchScalarGridSpec(
            num_scalar_prefetch=0,
            grid=(num_row_blocks, num_n_blocks),
            in_specs=[
                pl.BlockSpec((m_tile, E), lambda m, n: (m, 0)),
                pl.BlockSpec((E, tn), lambda m, n: (0, n)),
                pl.BlockSpec((1, tn), lambda m, n: (0, n)),
            ],
            out_specs=pl.BlockSpec((m_tile, tn), lambda m, n: (m, n)),
        ),
        compiler_params=pltpu.CompilerParams(
            dimension_semantics=("parallel", "parallel"),
            vmem_limit_bytes=vmem_limit),
    )(x_flat, wih_cat, b_cat)

    g = g_flat.reshape(S_pad, B_pad, 8 * H)

    # Megacore (v7x) split: leading "parallel" batch-shard axis when B_pad >= 32.
    nb = 2 if B_pad % 32 == 0 else 1
    B_shard = B_pad // nb

    # ---- Kernel 2: chunked, interleaved bidirectional recurrence. ----
    # fwd/bwd in_specs read only their 4H-wide gate block of g (block index 0 / 1
    # along the 8H axis) instead of the full 8H slab -> half the read DMA.
    hidden, cell = pl.pallas_call(
        _bilstm_recurrence_kernel,
        out_shape=(jax.ShapeDtypeStruct((2, B_pad, H), jnp.float32),
                   jax.ShapeDtypeStruct((2, B_pad, H), jnp.float32)),
        grid_spec=pltpu.PrefetchScalarGridSpec(
            num_scalar_prefetch=0,
            grid=(nb, num_chunks),
            in_specs=[
                pl.BlockSpec((B_shard, 1), lambda b, i: (b, 0)),                  # lens
                pl.BlockSpec((T, B_shard, 4 * H), lambda b, i: (i, b, 0)),        # fwd gates
                pl.BlockSpec((T, B_shard, 4 * H),
                             lambda b, i: (num_chunks - 1 - i, b, 1)),            # bwd gates
                pl.BlockSpec((H, 4 * H), lambda b, i: (0, 0)),                    # whh_f
                pl.BlockSpec((H, 4 * H), lambda b, i: (0, 0)),                    # whh_b
            ],
            out_specs=[
                pl.BlockSpec((2, B_shard, H), lambda b, i: (0, b, 0)),
                pl.BlockSpec((2, B_shard, H), lambda b, i: (0, b, 0)),
            ],
            scratch_shapes=[pltpu.VMEM((B_shard, H), jnp.float32)] * 4,           # h_f c_f h_b c_b
        ),
        compiler_params=pltpu.CompilerParams(
            dimension_semantics=("parallel", "arbitrary"),
            vmem_limit_bytes=vmem_limit),
    )(lens2d, g, g, whh_f, whh_b)

    return hidden[:, :B, :], cell[:, :B, :]


# --------------------------------------------------------------------------- #
# Parameters & pure-JAX reference (for self-check).                            #
# --------------------------------------------------------------------------- #
def init_params(key, vocab_size, embedding_size, hidden_size):
    E, H = embedding_size, hidden_size
    keys = jax.random.split(key, 9)
    s = 1.0 / float(np.sqrt(H))

    def u(k, shape):
        return jax.random.uniform(k, shape, jnp.float32, -s, s)

    return {
        "embedding": jax.random.normal(keys[0], (vocab_size, E), jnp.float32),
        # weights stored transposed relative to PyTorch: (E, 4H) / (H, 4H), gate order i,f,g,o
        "wih_f": u(keys[1], (E, 4 * H)),
        "whh_f": u(keys[2], (H, 4 * H)),
        "b_f":   u(keys[3], (1, 4 * H)) + u(keys[4], (1, 4 * H)),   # b_ih + b_hh
        "wih_b": u(keys[5], (E, 4 * H)),
        "whh_b": u(keys[6], (H, 4 * H)),
        "b_b":   u(keys[7], (1, 4 * H)) + u(keys[8], (1, 4 * H)),
    }


def _reference_forward(params, tokens, input_lens):
    """Pure-JAX f32 reference (masked packed bi-LSTM, plain sigmoid/tanh)."""
    x = jnp.take(params["embedding"], tokens, axis=0)        # (B, S, E)
    B, S, _ = x.shape
    H = params["whh_f"].shape[0]
    lens = input_lens.astype(jnp.int32)[:, None]             # (B, 1)

    def cell(x_t, h, c, wih, whh, b):
        g = x_t @ wih + h @ whh + b
        i = jax.nn.sigmoid(g[:, 0 * H:1 * H])
        f = jax.nn.sigmoid(g[:, 1 * H:2 * H])
        gg = jnp.tanh(g[:, 2 * H:3 * H])
        o = jax.nn.sigmoid(g[:, 3 * H:4 * H])
        c_new = f * c + i * gg
        return o * jnp.tanh(c_new), c_new

    def run(direction):
        wih = params["wih_" + direction]
        whh = params["whh_" + direction]
        b = params["b_" + direction]
        h = jnp.zeros((B, H), jnp.float32)
        c = jnp.zeros((B, H), jnp.float32)
        ts = range(S) if direction == "f" else range(S - 1, -1, -1)
        for t in ts:
            h_new, c_new = cell(x[:, t, :], h, c, wih, whh, b)
            m = (t < lens)
            h = jnp.where(m, h_new, h)
            c = jnp.where(m, c_new, c)
        return h, c

    hf, cf = run("f")
    hb, cb = run("b")
    return jnp.stack([hf, hb]), jnp.stack([cf, cb])


if __name__ == "__main__":
    vocab_size, embedding_size, hidden_size = 50, 32, 32
    batch, seq_len = 2, 8

    key = jax.random.PRNGKey(0)
    k_param, k_tok = jax.random.split(key)
    params = init_params(k_param, vocab_size, embedding_size, hidden_size)

    tokens = jax.random.randint(k_tok, (batch, seq_len), 0, vocab_size, jnp.int32)
    input_lens = jnp.array([8, 5], dtype=jnp.int32)   # sorted descending (enforce_sorted=True)

    hidden, cell = encoder_forward(params, tokens, input_lens)
    jax.block_until_ready((hidden, cell))

    ref_h, ref_c = _reference_forward(params, tokens, input_lens)
    # bf16 MXU operands / bf16 G (f32 accumulation and f32 h/c carries) -> looser
    # tolerance vs the f32 reference, per the performance review.
    np.testing.assert_allclose(np.asarray(hidden), np.asarray(ref_h), rtol=5e-2, atol=5e-2)
    np.testing.assert_allclose(np.asarray(cell), np.asarray(ref_c), rtol=5e-2, atol=5e-2)

    assert hidden.shape == (2, batch, hidden_size)
    assert cell.shape == (2, batch, hidden_size)
    print("KERNEL_OK")
</pallas_src>

<mosaic_0001>
module attributes {stable_mosaic.version = 11 : i64} {
  func.func @_input_proj_kernel(%arg0: i32, %arg1: i32, %arg2: memref<512x32xbf16, #tpu.memory_space<vmem>>, %arg3: memref<32x256xbf16, #tpu.memory_space<vmem>>, %arg4: memref<1x256xf32, #tpu.memory_space<vmem>>, %arg5: memref<512x256xbf16, #tpu.memory_space<vmem>>) attributes {dimension_semantics = [#tpu.dimension_semantics<parallel>, #tpu.dimension_semantics<parallel>], iteration_bounds = array<i64: 1, 1>, scalar_prefetch = 0 : i64, scratch_operands = 0 : i64, tpu.core_type = #tpu.core_type<tc>, window_params = [{transform_indices = @transform_0, window_bounds = array<i64: 512, 32>}, {transform_indices = @transform_1, window_bounds = array<i64: 32, 256>}, {transform_indices = @transform_2, window_bounds = array<i64: 1, 256>}, {transform_indices = @transform_3, window_bounds = array<i64: 512, 256>}]} {
    %c0 = arith.constant 0 : index
    %c0_0 = arith.constant 0 : index
    %0 = vector.load %arg2[%c0, %c0_0] : memref<512x32xbf16, #tpu.memory_space<vmem>>, vector<512x32xbf16>
    %c0_1 = arith.constant 0 : index
    %c0_2 = arith.constant 0 : index
    %1 = vector.load %arg3[%c0_1, %c0_2] : memref<32x256xbf16, #tpu.memory_space<vmem>>, vector<32x256xbf16>
    %cst = arith.constant dense<0.000000e+00> : vector<512x256xf32>
    %2 = tpu.matmul %0, %1, %cst {dimension_numbers = #tpu.dot_dimension_numbers<[1], [0], [0], [1], [0, 0, 1, 1], [], []>} : vector<512x32xbf16>, vector<32x256xbf16>, vector<512x256xf32> -> vector<512x256xf32>
    %c0_3 = arith.constant 0 : index
    %c0_4 = arith.constant 0 : index
    %3 = vector.load %arg4[%c0_3, %c0_4] : memref<1x256xf32, #tpu.memory_space<vmem>>, vector<1x256xf32>
    %4 = vector.broadcast %3 : vector<1x256xf32> to vector<512x256xf32>
    %5 = arith.addf %2, %4 : vector<512x256xf32>
    %6 = arith.truncf %5 : vector<512x256xf32> to vector<512x256xbf16>
    %c0_5 = arith.constant 0 : index
    %c0_6 = arith.constant 0 : index
    %7 = vector.load %arg5[%c0_5, %c0_6] : memref<512x256xbf16, #tpu.memory_space<vmem>>, vector<512x256xbf16>
    tpu.vector_store %arg5[%c0_5, %c0_6], %6 {strides = array<i32>} : memref<512x256xbf16, #tpu.memory_space<vmem>>, vector<512x256xbf16>,
    return
  }
  func.func @transform_0(%arg0: i32, %arg1: i32) -> (i32, i32) {
    %c0_i32 = arith.constant 0 : i32
    %c0_i32_0 = arith.constant 0 : i32
    return %arg0, %c0_i32 : i32, i32
  }
  func.func @transform_1(%arg0: i32, %arg1: i32) -> (i32, i32) {
    %c0_i32 = arith.constant 0 : i32
    %c0_i32_0 = arith.constant 0 : i32
    return %c0_i32, %arg1 : i32, i32
  }
  func.func @transform_2(%arg0: i32, %arg1: i32) -> (i32, i32) {
    %c0_i32 = arith.constant 0 : i32
    %c0_i32_0 = arith.constant 0 : i32
    return %c0_i32, %arg1 : i32, i32
  }
  func.func @transform_3(%arg0: i32, %arg1: i32) -> (i32, i32) {
    %c0_i32 = arith.constant 0 : i32
    return %arg0, %arg1 : i32, i32
  }
}

</mosaic_0001>

<llo_original>
// kernel: tpu_custom_call.1
$region0: #{tpu_custom_call.1}
  #allocation0 [shape = 'u32[]', space=smem, size = 0x4, offset = 0x4, fixed_abs, tag = 'smem constant byte address 0x4 - core index']
  #allocation1 [shape = 'u32[144,128]{1,0:T(1,128)}', space=vmem, size = 0x12000, scoped, tag = 'internal scratch']
  %s0 = inlined_call_operand.vmem [shape: bf16[512,32], index: 0, kind: input, shape index: {}]
  %s1 = inlined_call_operand.vmem [shape: bf16[32,256], index: 1, kind: input, shape index: {}]
  %s2 = inlined_call_operand.vmem [shape: f32[1,256], index: 2, kind: input, shape index: {}]
  %s3 = inlined_call_operand.hbm [shape: bf16[512,256], index: 3, kind: output, shape index: {}]
  %s4 = sld [smem:[#allocation0]]
  $region22: #{tpu_custom_call.1} parent=0
    _
  %s6 = ssub.s32 1, %s4
  %s7 = scalar_select 0, %s6, %s4
  $region1: #{tpu_custom_call.1} parent=0
    #allocation2 [shape = 'u8[262144]{0}', space=vmem, size = 0x40000, scoped, tag = 'output window, operand 0, single buffered']
    #allocation3 [shape = 's32[1]{0}', space=sflag, size = 0x4, scoped, tag = 'scoped memory for tpu_custom_call.1']
    %8 = vsyncpa [#allocation3], 0
    // Predicated region
    $region2: #{tpu_custom_call.1} parent=1 // pred_check
      _
    $region3: #{tpu_custom_call.1} parent=1 // pred_check_branch
      %10 = sbr.rel (0) target = $region5
    $region4: #{tpu_custom_call.1} parent=1 // pred_region
      _
    $region5: #{tpu_custom_call.1} parent=1 // pred_fallthru
      _
    // Predicated region
    $region6: #{tpu_custom_call.1} parent=1 // pred_check
      _
    $region7: #{tpu_custom_call.1} parent=1 // pred_check_branch
      %12 = sbr.rel (0) target = $region9
    $region8: #{tpu_custom_call.1} parent=1 // pred_region
      _
    $region9: #{tpu_custom_call.1} parent=1 // pred_fallthru
      _
    // Predicated region
    $region10: #{tpu_custom_call.1} parent=1 // pred_check
      _
    $region11: #{tpu_custom_call.1} parent=1 // pred_check_branch
      %14 = sbr.rel (0) target = $region13
    $region12: #{tpu_custom_call.1} parent=1 // pred_region
      _
    $region13: #{tpu_custom_call.1} parent=1 // pred_fallthru
      _
    %v16 = vld [vmem:[%s0] sm:$0xf]
    %v17 = vld [vmem:[%s0 + $0x4] sm:$0xf]
    %v18 = vld [vmem:[%s0 + $0x8] sm:$0xf]
    %v19 = vld [vmem:[%s0 + $0xc] sm:$0xf]
    %v20 = vld [vmem:[%s0 + $0x10] sm:$0xf]
    %v21 = vld [vmem:[%s0 + $0x14] sm:$0xf]
    %v22 = vld [vmem:[%s0 + $0x18] sm:$0xf]
    %v23 = vld [vmem:[%s0 + $0x1c] sm:$0xf]
    %v24 = vld [vmem:[%s0 + $0x20] sm:$0xf]
    %v25 = vld [vmem:[%s0 + $0x24] sm:$0xf]
    %v26 = vld [vmem:[%s0 + $0x28] sm:$0xf]
    %v27 = vld [vmem:[%s0 + $0x2c] sm:$0xf]
    %v28 = vld [vmem:[%s0 + $0x30] sm:$0xf]
    %v29 = vld [vmem:[%s0 + $0x34] sm:$0xf]
    %v30 = vld [vmem:[%s0 + $0x38] sm:$0xf]
    %v31 = vld [vmem:[%s0 + $0x3c] sm:$0xf]
    %v32 = vld [vmem:[%s0 + $0x40] sm:$0xf]
    %v33 = vld [vmem:[%s0 + $0x44] sm:$0xf]
    %v34 = vld [vmem:[%s0 + $0x48] sm:$0xf]
    %v35 = vld [vmem:[%s0 + $0x4c] sm:$0xf]
    %v36 = vld [vmem:[%s0 + $0x50] sm:$0xf]
    %v37 = vld [vmem:[%s0 + $0x54] sm:$0xf]
    %v38 = vld [vmem:[%s0 + $0x58] sm:$0xf]
    %v39 = vld [vmem:[%s0 + $0x5c] sm:$0xf]
    %v40 = vld [vmem:[%s0 + $0x60] sm:$0xf]
    %v41 = vld [vmem:[%s0 + $0x64] sm:$0xf]
    %v42 = vld [vmem:[%s0 + $0x68] sm:$0xf]
    %v43 = vld [vmem:[%s0 + $0x6c] sm:$0xf]
    %v44 = vld [vmem:[%s0 + $0x70] sm:$0xf]
    %v45 = vld [vmem:[%s0 + $0x74] sm:$0xf]
    %v46 = vld [vmem:[%s0 + $0x78] sm:$0xf]
    %v47 = vld [vmem:[%s0 + $0x7c] sm:$0xf]
    %v48 = vld [vmem:[%s0 + $0x80] sm:$0xf]
    %v49 = vld [vmem:[%s0 + $0x84] sm:$0xf]
    %v50 = vld [vmem:[%s0 + $0x88] sm:$0xf]
    %v51 = vld [vmem:[%s0 + $0x8c] sm:$0xf]
    %v52 = vld [vmem:[%s0 + $0x90] sm:$0xf]
    %v53 = vld [vmem:[%s0 + $0x94] sm:$0xf]
    %v54 = vld [vmem:[%s0 + $0x98] sm:$0xf]
    %v55 = vld [vmem:[%s0 + $0x9c] sm:$0xf]
    %v56 = vld [vmem:[%s0 + $0xa0] sm:$0xf]
    %v57 = vld [vmem:[%s0 + $0xa4] sm:$0xf]
    %v58 = vld [vmem:[%s0 + $0xa8] sm:$0xf]
    %v59 = vld [vmem:[%s0 + $0xac] sm:$0xf]
    %v60 = vld [vmem:[%s0 + $0xb0] sm:$0xf]
    %v61 = vld [vmem:[%s0 + $0xb4] sm:$0xf]
    %v62 = vld [vmem:[%s0 + $0xb8] sm:$0xf]
    %v63 = vld [vmem:[%s0 + $0xbc] sm:$0xf]
    %v64 = vld [vmem:[%s0 + $0xc0] sm:$0xf]
    %v65 = vld [vmem:[%s0 + $0xc4] sm:$0xf]
    %v66 = vld [vmem:[%s0 + $0xc8] sm:$0xf]
    %v67 = vld [vmem:[%s0 + $0xcc] sm:$0xf]
    %v68 = vld [vmem:[%s0 + $0xd0] sm:$0xf]
    %v69 = vld [vmem:[%s0 + $0xd4] sm:$0xf]
    %v70 = vld [vmem:[%s0 + $0xd8] sm:$0xf]
    %v71 = vld [vmem:[%s0 + $0xdc] sm:$0xf]
    %v72 = vld [vmem:[%s0 + $0xe0] sm:$0xf]
    %v73 = vld [vmem:[%s0 + $0xe4] sm:$0xf]
    %v74 = vld [vmem:[%s0 + $0xe8] sm:$0xf]
    %v75 = vld [vmem:[%s0 + $0xec] sm:$0xf]
    %v76 = vld [vmem:[%s0 + $0xf0] sm:$0xf]
    %v77 = vld [vmem:[%s0 + $0xf4] sm:$0xf]
    %v78 = vld [vmem:[%s0 + $0xf8] sm:$0xf]
    %v79 = vld [vmem:[%s0 + $0xfc] sm:$0xf]
    %v80 = vld [vmem:[%s1] sm:$0xff]
    %v81 = vld [vmem:[%s1 + $0x8] sm:$0xff]
    %v82 = vld [vmem:[%s1 + $0x10] sm:$0xff]
    %v83 = vld [vmem:[%s1 + $0x18] sm:$0xff]
    %v84 = vld [vmem:[%s2] sm:$0x3]
    %v86 = vlaneseq
    %v87 = vshrl.u32 %v86, 7
    %v88 = vsub.s32 0, %v87
    %v89 = vrot.slane %v84, %v88
    %v90 = vlaneseq
    %v91 = vshrl.u32 %v90, 7
    %v92 = vsub.s32 1, %v91
    %v93 = vrot.slane %v84, %v92
    %v160 = vunpack.c.l.b16 %v16
    %v161 = vunpack.c.l.b16 %v17
    %v162 = vunpack.c.l.b16 %v18
    %v163 = vunpack.c.l.b16 %v19
    %v164 = vunpack.c.l.b16 %v20
    %v165 = vunpack.c.l.b16 %v21
    %v166 = vunpack.c.l.b16 %v22
    %v167 = vunpack.c.l.b16 %v23
    %v168 = vunpack.c.l.b16 %v24
    %v169 = vunpack.c.l.b16 %v25
    %v170 = vunpack.c.l.b16 %v26
    %v171 = vunpack.c.l.b16 %v27
    %v172 = vunpack.c.l.b16 %v28
    %v173 = vunpack.c.l.b16 %v29
    %v174 = vunpack.c.l.b16 %v30
    %v175 = vunpack.c.l.b16 %v31
    %v176 = vunpack.c.l.b16 %v32
    %v177 = vunpack.c.l.b16 %v33
    %v178 = vunpack.c.l.b16 %v34
    %v179 = vunpack.c.l.b16 %v35
    %v180 = vunpack.c.l.b16 %v36
    %v181 = vunpack.c.l.b16 %v37
    %v182 = vunpack.c.l.b16 %v38
    %v183 = vunpack.c.l.b16 %v39
    %v184 = vunpack.c.l.b16 %v40
    %v185 = vunpack.c.l.b16 %v41
    %v186 = vunpack.c.l.b16 %v42
    %v187 = vunpack.c.l.b16 %v43
    %v188 = vunpack.c.l.b16 %v44
    %v189 = vunpack.c.l.b16 %v45
    %v190 = vunpack.c.l.b16 %v46
    %v191 = vunpack.c.l.b16 %v47
    %v192 = vunpack.c.l.b16 %v48
    %v193 = vunpack.c.l.b16 %v49
    %v194 = vunpack.c.l.b16 %v50
    %v195 = vunpack.c.l.b16 %v51
    %v196 = vunpack.c.l.b16 %v52
    %v197 = vunpack.c.l.b16 %v53
    %v198 = vunpack.c.l.b16 %v54
    %v199 = vunpack.c.l.b16 %v55
    %v200 = vunpack.c.l.b16 %v56
    %v201 = vunpack.c.l.b16 %v57
    %v202 = vunpack.c.l.b16 %v58
    %v203 = vunpack.c.l.b16 %v59
    %v204 = vunpack.c.l.b16 %v60
    %v205 = vunpack.c.l.b16 %v61
    %v206 = vunpack.c.l.b16 %v62
    %v207 = vunpack.c.l.b16 %v63
    %v208 = vunpack.c.l.b16 %v64
    %v209 = vunpack.c.l.b16 %v65
    %v210 = vunpack.c.l.b16 %v66
    %v211 = vunpack.c.l.b16 %v67
    %v212 = vunpack.c.l.b16 %v68
    %v213 = vunpack.c.l.b16 %v69
    %v214 = vunpack.c.l.b16 %v70
    %v215 = vunpack.c.l.b16 %v71
    %v216 = vunpack.c.l.b16 %v72
    %v217 = vunpack.c.l.b16 %v73
    %v218 = vunpack.c.l.b16 %v74
    %v219 = vunpack.c.l.b16 %v75
    %v220 = vunpack.c.l.b16 %v76
    %v221 = vunpack.c.l.b16 %v77
    %v222 = vunpack.c.l.b16 %v78
    %v223 = vunpack.c.l.b16 %v79
    %v224 = vpack.c.b16 %v161, %v160
    %v225 = vpack.c.b16 %v163, %v162
    %v226 = vpack.c.b16 %v165, %v164
    %v227 = vpack.c.b16 %v167, %v166
    %v228 = vpack.c.b16 %v169, %v168
    %v229 = vpack.c.b16 %v171, %v170
    %v230 = vpack.c.b16 %v173, %v172
    %v231 = vpack.c.b16 %v175, %v174
    %v232 = vpack.c.b16 %v177, %v176
    %v233 = vpack.c.b16 %v179, %v178
    %v234 = vpack.c.b16 %v181, %v180
    %v235 = vpack.c.b16 %v183, %v182
    %v236 = vpack.c.b16 %v185, %v184
    %v237 = vpack.c.b16 %v187, %v186
    %v238 = vpack.c.b16 %v189, %v188
    %v239 = vpack.c.b16 %v191, %v190
    %v240 = vpack.c.b16 %v193, %v192
    %v241 = vpack.c.b16 %v195, %v194
    %v242 = vpack.c.b16 %v197, %v196
    %v243 = vpack.c.b16 %v199, %v198
    %v244 = vpack.c.b16 %v201, %v200
    %v245 = vpack.c.b16 %v203, %v202
    %v246 = vpack.c.b16 %v205, %v204
    %v247 = vpack.c.b16 %v207, %v206
    %v248 = vpack.c.b16 %v209, %v208
    %v249 = vpack.c.b16 %v211, %v210
    %v250 = vpack.c.b16 %v213, %v212
    %v251 = vpack.c.b16 %v215, %v214
    %v252 = vpack.c.b16 %v217, %v216
    %v253 = vpack.c.b16 %v219, %v218
    %v254 = vpack.c.b16 %v221, %v220
    %v255 = vpack.c.b16 %v223, %v222
    %v260 = vunpack.c.l.b16 %v80
    %v261 = vunpack.c.h.b16 %v80
    %v262 = vunpack.c.l.b16 %v81
    %v263 = vunpack.c.h.b16 %v81
    %v264 = vunpack.c.l.b16 %v82
    %v265 = vunpack.c.h.b16 %v82
    %v266 = vunpack.c.l.b16 %v83
    %v267 = vunpack.c.h.b16 %v83
    %v268 = vpack.c.b16 %v262, %v260
    %v269 = vpack.c.b16 %v263, %v261
    %v270 = vpack.c.b16 %v266, %v264
    %v271 = vpack.c.b16 %v267, %v265
    %vm276 = vcmask 261120
    %v278 = vsel %vm276, %v224, 0
    %v281 = vsel %vm276, %v225, 0
    %v284 = vsel %vm276, %v226, 0
    %v287 = vsel %vm276, %v227, 0
    %v290 = vsel %vm276, %v228, 0
    %v293 = vsel %vm276, %v229, 0
    %v296 = vsel %vm276, %v230, 0
    %v299 = vsel %vm276, %v231, 0
    %v302 = vsel %vm276, %v232, 0
    %v305 = vsel %vm276, %v233, 0
    %v308 = vsel %vm276, %v234, 0
    %v311 = vsel %vm276, %v235, 0
    %v314 = vsel %vm276, %v236, 0
    %v317 = vsel %vm276, %v237, 0
    %v320 = vsel %vm276, %v238, 0
    %v323 = vsel %vm276, %v239, 0
    %v326 = vsel %vm276, %v240, 0
    %v329 = vsel %vm276, %v241, 0
    %v332 = vsel %vm276, %v242, 0
    %v335 = vsel %vm276, %v243, 0
    %v338 = vsel %vm276, %v244, 0
    %v341 = vsel %vm276, %v245, 0
    %v344 = vsel %vm276, %v246, 0
    %v347 = vsel %vm276, %v247, 0
    %v350 = vsel %vm276, %v248, 0
    %v353 = vsel %vm276, %v249, 0
    %v356 = vsel %vm276, %v250, 0
    %v359 = vsel %vm276, %v251, 0
    %v362 = vsel %vm276, %v252, 0
    %v365 = vsel %vm276, %v253, 0
    %v368 = vsel %vm276, %v254, 0
    %v371 = vsel %vm276, %v255, 0
    %373 = vmatprep.subr.bf16.mxu0 0
    %374 = vmatpush1.bf16.msra.mxu0 0
    %375 = vmatprep.subr.bf16.mxu0 0
    %376 = vmatpush1.bf16.msra.mxu0 0
    %377 = vmatprep.subr.bf16.mxu0 0
    %378 = vmatpush1.bf16.msra.mxu0 0
    %379 = vmatprep.subr.bf16.mxu0 0
    %380 = vmatpush1.bf16.msra.mxu0 0
    %381 = vmatprep.subr.bf16.mxu0 0
    %382 = vmatpush1.bf16.msra.mxu0 0
    %383 = vmatprep.subr.bf16.mxu0 0
    %384 = vmatpush1.bf16.msra.mxu0 0
    %385 = vmatprep.subr.bf16.mxu0 %v271
    %386 = vmatpush1.bf16.msra.mxu0 %v270
    %387 = vmatprep.subr.bf16.mxu0 %v269
    %388 = vmatpush1.bf16.msra.mxu0 %v268
    %389 = vmatprep.subr.bf16.mxu0 0
    %390 = vmatpush2.bf16.msra.mxu0 0
    %391 = vmatprep.subr.bf16.mxu0 0
    %392 = vmatpush2.bf16.msra.mxu0 0
    %393 = vmatprep.subr.bf16.mxu0 0
    %394 = vmatpush2.bf16.msra.mxu0 0
    %395 = vmatprep.subr.bf16.mxu0 0
    %396 = vmatpush2.bf16.msra.mxu0 0
    %397 = vmatprep.subr.bf16.mxu0 0
    %398 = vmatpush2.bf16.msra.mxu0 0
    %399 = vmatprep.subr.bf16.mxu0 0
    %400 = vmatpush2.bf16.msra.mxu0 0
    %401 = vmatprep.subr.bf16.mxu0 0
    %402 = vmatpush2.bf16.msra.mxu0 0
    %403 = vmatprep.subr.bf16.mxu0 0
    %404 = vmatpush2.bf16.msra.mxu0 0
    %405 = vmatprep.mubr.bf16.mxu0 0
    %406 = vmatmul.mubr.bf16.gmra.mxu0 %v278
    %v407 = vpop.f32.mrf.mxu0
    %v408 = vadd.f32 %v89, %v407
    %v409 = vpop.f32.mrf.mxu0
    %v410 = vadd.f32 %v93, %v409
    %v411 = vpop.f32.mrf.mxu0
    %v412 = vadd.f32 %v89, %v411
    %v413 = vpop.f32.mrf.mxu0
    %v414 = vadd.f32 %v93, %v413
    %415 = vmatprep.mubr.bf16.mxu0 0
    %416 = vmatmul.mubr.bf16.gmra.mxu0 %v281
    %v417 = vpop.f32.mrf.mxu0
    %v418 = vadd.f32 %v89, %v417
    %v419 = vpop.f32.mrf.mxu0
    %v420 = vadd.f32 %v93, %v419
    %v421 = vpop.f32.mrf.mxu0
    %v422 = vadd.f32 %v89, %v421
    %v423 = vpop.f32.mrf.mxu0
    %v424 = vadd.f32 %v93, %v423
    %425 = vmatprep.mubr.bf16.mxu0 0
    %426 = vmatmul.mubr.bf16.gmra.mxu0 %v284
    %v427 = vpop.f32.mrf.mxu0
    %v428 = vadd.f32 %v89, %v427
    %v429 = vpop.f32.mrf.mxu0
    %v430 = vadd.f32 %v93, %v429
    %v431 = vpop.f32.mrf.mxu0
    %v432 = vadd.f32 %v89, %v431
    %v433 = vpop.f32.mrf.mxu0
    %v434 = vadd.f32 %v93, %v433
    %435 = vmatprep.mubr.bf16.mxu0 0
    %436 = vmatmul.mubr.bf16.gmra.mxu0 %v287
    %v437 = vpop.f32.mrf.mxu0
    %v438 = vadd.f32 %v89, %v437
    %v439 = vpop.f32.mrf.mxu0
    %v440 = vadd.f32 %v93, %v439
    %v441 = vpop.f32.mrf.mxu0
    %v442 = vadd.f32 %v89, %v441
    %v443 = vpop.f32.mrf.mxu0
    %v444 = vadd.f32 %v93, %v443
    %445 = vmatprep.mubr.bf16.mxu0 0
    %446 = vmatmul.mubr.bf16.gmra.mxu0 %v290
    %v447 = vpop.f32.mrf.mxu0
    %v448 = vadd.f32 %v89, %v447
    %v449 = vpop.f32.mrf.mxu0
    %v450 = vadd.f32 %v93, %v449
    %v451 = vpop.f32.mrf.mxu0
    %v452 = vadd.f32 %v89, %v451
    %v453 = vpop.f32.mrf.mxu0
    %v454 = vadd.f32 %v93, %v453
    %455 = vmatprep.mubr.bf16.mxu0 0
    %456 = vmatmul.mubr.bf16.gmra.mxu0 %v293
    %v457 = vpop.f32.mrf.mxu0
    %v458 = vadd.f32 %v89, %v457
    %v459 = vpop.f32.mrf.mxu0
    %v460 = vadd.f32 %v93, %v459
    %v461 = vpop.f32.mrf.mxu0
    %v462 = vadd.f32 %v89, %v461
    %v463 = vpop.f32.mrf.mxu0
    %v464 = vadd.f32 %v93, %v463
    %465 = vmatprep.mubr.bf16.mxu0 0
    %466 = vmatmul.mubr.bf16.gmra.mxu0 %v296
    %v467 = vpop.f32.mrf.mxu0
    %v468 = vadd.f32 %v89, %v467
    %v469 = vpop.f32.mrf.mxu0
    %v470 = vadd.f32 %v93, %v469
    %v471 = vpop.f32.mrf.mxu0
    %v472 = vadd.f32 %v89, %v471
    %v473 = vpop.f32.mrf.mxu0
    %v474 = vadd.f32 %v93, %v473
    %475 = vmatprep.mubr.bf16.mxu0 0
    %476 = vmatmul.mubr.bf16.gmra.mxu0 %v299
    %v477 = vpop.f32.mrf.mxu0
    %v478 = vadd.f32 %v89, %v477
    %v479 = vpop.f32.mrf.mxu0
    %v480 = vadd.f32 %v93, %v479
    %v481 = vpop.f32.mrf.mxu0
    %v482 = vadd.f32 %v89, %v481
    %v483 = vpop.f32.mrf.mxu0
    %v484 = vadd.f32 %v93, %v483
    %485 = vmatprep.mubr.bf16.mxu0 0
    %486 = vmatmul.mubr.bf16.gmra.mxu0 %v302
    %v487 = vpop.f32.mrf.mxu0
    %v488 = vadd.f32 %v89, %v487
    %v489 = vpop.f32.mrf.mxu0
    %v490 = vadd.f32 %v93, %v489
    %v491 = vpop.f32.mrf.mxu0
    %v492 = vadd.f32 %v89, %v491
    %v493 = vpop.f32.mrf.mxu0
    %v494 = vadd.f32 %v93, %v493
    %495 = vmatprep.mubr.bf16.mxu0 0
    %496 = vmatmul.mubr.bf16.gmra.mxu0 %v305
    %v497 = vpop.f32.mrf.mxu0
    %v498 = vadd.f32 %v89, %v497
    %v499 = vpop.f32.mrf.mxu0
    %v500 = vadd.f32 %v93, %v499
    %v501 = vpop.f32.mrf.mxu0
    %v502 = vadd.f32 %v89, %v501
    %v503 = vpop.f32.mrf.mxu0
    %v504 = vadd.f32 %v93, %v503
    %505 = vmatprep.mubr.bf16.mxu0 0
    %506 = vmatmul.mubr.bf16.gmra.mxu0 %v308
    %v507 = vpop.f32.mrf.mxu0
    %v508 = vadd.f32 %v89, %v507
    %v509 = vpop.f32.mrf.mxu0
    %v510 = vadd.f32 %v93, %v509
    %v511 = vpop.f32.mrf.mxu0
    %v512 = vadd.f32 %v89, %v511
    %v513 = vpop.f32.mrf.mxu0
    %v514 = vadd.f32 %v93, %v513
    %515 = vmatprep.mubr.bf16.mxu0 0
    %516 = vmatmul.mubr.bf16.gmra.mxu0 %v311
    %v517 = vpop.f32.mrf.mxu0
    %v518 = vadd.f32 %v89, %v517
    %v519 = vpop.f32.mrf.mxu0
    %v520 = vadd.f32 %v93, %v519
    %v521 = vpop.f32.mrf.mxu0
    %v522 = vadd.f32 %v89, %v521
    %v523 = vpop.f32.mrf.mxu0
    %v524 = vadd.f32 %v93, %v523
    %525 = vmatprep.mubr.bf16.mxu0 0
    %526 = vmatmul.mubr.bf16.gmra.mxu0 %v314
    %v527 = vpop.f32.mrf.mxu0
    %v528 = vadd.f32 %v89, %v527
    %v529 = vpop.f32.mrf.mxu0
    %v530 = vadd.f32 %v93, %v529
    %v531 = vpop.f32.mrf.mxu0
    %v532 = vadd.f32 %v89, %v531
    %v533 = vpop.f32.mrf.mxu0
    %v534 = vadd.f32 %v93, %v533
    %535 = vmatprep.mubr.bf16.mxu0 0
    %536 = vmatmul.mubr.bf16.gmra.mxu0 %v317
    %v537 = vpop.f32.mrf.mxu0
    %v538 = vadd.f32 %v89, %v537
    %v539 = vpop.f32.mrf.mxu0
    %v540 = vadd.f32 %v93, %v539
    %v541 = vpop.f32.mrf.mxu0
    %v542 = vadd.f32 %v89, %v541
    %v543 = vpop.f32.mrf.mxu0
    %v544 = vadd.f32 %v93, %v543
    %545 = vmatprep.mubr.bf16.mxu0 0
    %546 = vmatmul.mubr.bf16.gmra.mxu0 %v320
    %v547 = vpop.f32.mrf.mxu0
    %v548 = vadd.f32 %v89, %v547
    %v549 = vpop.f32.mrf.mxu0
    %v550 = vadd.f32 %v93, %v549
    %v551 = vpop.f32.mrf.mxu0
    %v552 = vadd.f32 %v89, %v551
    %v553 = vpop.f32.mrf.mxu0
    %v554 = vadd.f32 %v93, %v553
    %555 = vmatprep.mubr.bf16.mxu0 0
    %556 = vmatmul.mubr.bf16.gmra.mxu0 %v323
    %v557 = vpop.f32.mrf.mxu0
    %v558 = vadd.f32 %v89, %v557
    %v559 = vpop.f32.mrf.mxu0
    %v560 = vadd.f32 %v93, %v559
    %v561 = vpop.f32.mrf.mxu0
    %v562 = vadd.f32 %v89, %v561
    %v563 = vpop.f32.mrf.mxu0
    %v564 = vadd.f32 %v93, %v563
    %565 = vmatprep.mubr.bf16.mxu0 0
    %566 = vmatmul.mubr.bf16.gmra.mxu0 %v326
    %v567 = vpop.f32.mrf.mxu0
    %v568 = vadd.f32 %v89, %v567
    %v569 = vpop.f32.mrf.mxu0
    %v570 = vadd.f32 %v93, %v569
    %v571 = vpop.f32.mrf.mxu0
    %v572 = vadd.f32 %v89, %v571
    %v573 = vpop.f32.mrf.mxu0
    %v574 = vadd.f32 %v93, %v573
    %575 = vmatprep.mubr.bf16.mxu0 0
    %576 = vmatmul.mubr.bf16.gmra.mxu0 %v329
    %v577 = vpop.f32.mrf.mxu0
    %v578 = vadd.f32 %v89, %v577
    %v579 = vpop.f32.mrf.mxu0
    %v580 = vadd.f32 %v93, %v579
    %v581 = vpop.f32.mrf.mxu0
    %v582 = vadd.f32 %v89, %v581
    %v583 = vpop.f32.mrf.mxu0
    %v584 = vadd.f32 %v93, %v583
    %585 = vmatprep.mubr.bf16.mxu0 0
    %586 = vmatmul.mubr.bf16.gmra.mxu0 %v332
    %v587 = vpop.f32.mrf.mxu0
    %v588 = vadd.f32 %v89, %v587
    %v589 = vpop.f32.mrf.mxu0
    %v590 = vadd.f32 %v93, %v589
    %v591 = vpop.f32.mrf.mxu0
    %v592 = vadd.f32 %v89, %v591
    %v593 = vpop.f32.mrf.mxu0
    %v594 = vadd.f32 %v93, %v593
    %595 = vmatprep.mubr.bf16.mxu0 0
    %596 = vmatmul.mubr.bf16.gmra.mxu0 %v335
    %v597 = vpop.f32.mrf.mxu0
    %v598 = vadd.f32 %v89, %v597
    %v599 = vpop.f32.mrf.mxu0
    %v600 = vadd.f32 %v93, %v599
    %v601 = vpop.f32.mrf.mxu0
    %v602 = vadd.f32 %v89, %v601
    %v603 = vpop.f32.mrf.mxu0
    %v604 = vadd.f32 %v93, %v603
    %605 = vmatprep.mubr.bf16.mxu0 0
    %606 = vmatmul.mubr.bf16.gmra.mxu0 %v338
    %v607 = vpop.f32.mrf.mxu0
    %v608 = vadd.f32 %v89, %v607
    %v609 = vpop.f32.mrf.mxu0
    %v610 = vadd.f32 %v93, %v609
    %v611 = vpop.f32.mrf.mxu0
    %v612 = vadd.f32 %v89, %v611
    %v613 = vpop.f32.mrf.mxu0
    %v614 = vadd.f32 %v93, %v613
    %615 = vmatprep.mubr.bf16.mxu0 0
    %616 = vmatmul.mubr.bf16.gmra.mxu0 %v341
    %v617 = vpop.f32.mrf.mxu0
    %v618 = vadd.f32 %v89, %v617
    %v619 = vpop.f32.mrf.mxu0
    %v620 = vadd.f32 %v93, %v619
    %v621 = vpop.f32.mrf.mxu0
    %v622 = vadd.f32 %v89, %v621
    %v623 = vpop.f32.mrf.mxu0
    %v624 = vadd.f32 %v93, %v623
    %625 = vmatprep.mubr.bf16.mxu0 0
    %626 = vmatmul.mubr.bf16.gmra.mxu0 %v344
    %v627 = vpop.f32.mrf.mxu0
    %v628 = vadd.f32 %v89, %v627
    %v629 = vpop.f32.mrf.mxu0
    %v630 = vadd.f32 %v93, %v629
    %v631 = vpop.f32.mrf.mxu0
    %v632 = vadd.f32 %v89, %v631
    %v633 = vpop.f32.mrf.mxu0
    %v634 = vadd.f32 %v93, %v633
    %635 = vmatprep.mubr.bf16.mxu0 0
    %636 = vmatmul.mubr.bf16.gmra.mxu0 %v347
    %v637 = vpop.f32.mrf.mxu0
    %v638 = vadd.f32 %v89, %v637
    %v639 = vpop.f32.mrf.mxu0
    %v640 = vadd.f32 %v93, %v639
    %v641 = vpop.f32.mrf.mxu0
    %v642 = vadd.f32 %v89, %v641
    %v643 = vpop.f32.mrf.mxu0
    %v644 = vadd.f32 %v93, %v643
    %645 = vmatprep.mubr.bf16.mxu0 0
    %646 = vmatmul.mubr.bf16.gmra.mxu0 %v350
    %v647 = vpop.f32.mrf.mxu0
    %v648 = vadd.f32 %v89, %v647
    %v649 = vpop.f32.mrf.mxu0
    %v650 = vadd.f32 %v93, %v649
    %v651 = vpop.f32.mrf.mxu0
    %v652 = vadd.f32 %v89, %v651
    %v653 = vpop.f32.mrf.mxu0
    %v654 = vadd.f32 %v93, %v653
    %655 = vmatprep.mubr.bf16.mxu0 0
    %656 = vmatmul.mubr.bf16.gmra.mxu0 %v353
    %v657 = vpop.f32.mrf.mxu0
    %v658 = vadd.f32 %v89, %v657
    %v659 = vpop.f32.mrf.mxu0
    %v660 = vadd.f32 %v93, %v659
    %v661 = vpop.f32.mrf.mxu0
    %v662 = vadd.f32 %v89, %v661
    %v663 = vpop.f32.mrf.mxu0
    %v664 = vadd.f32 %v93, %v663
    %665 = vmatprep.mubr.bf16.mxu0 0
    %666 = vmatmul.mubr.bf16.gmra.mxu0 %v356
    %v667 = vpop.f32.mrf.mxu0
    %v668 = vadd.f32 %v89, %v667
    %v669 = vpop.f32.mrf.mxu0
    %v670 = vadd.f32 %v93, %v669
    %v671 = vpop.f32.mrf.mxu0
    %v672 = vadd.f32 %v89, %v671
    %v673 = vpop.f32.mrf.mxu0
    %v674 = vadd.f32 %v93, %v673
    %675 = vmatprep.mubr.bf16.mxu0 0
    %676 = vmatmul.mubr.bf16.gmra.mxu0 %v359
    %v677 = vpop.f32.mrf.mxu0
    %v678 = vadd.f32 %v89, %v677
    %v679 = vpop.f32.mrf.mxu0
    %v680 = vadd.f32 %v93, %v679
    %v681 = vpop.f32.mrf.mxu0
    %v682 = vadd.f32 %v89, %v681
    %v683 = vpop.f32.mrf.mxu0
    %v684 = vadd.f32 %v93, %v683
    %685 = vmatprep.mubr.bf16.mxu0 0
    %686 = vmatmul.mubr.bf16.gmra.mxu0 %v362
    %v687 = vpop.f32.mrf.mxu0
    %v688 = vadd.f32 %v89, %v687
    %v689 = vpop.f32.mrf.mxu0
    %v690 = vadd.f32 %v93, %v689
    %v691 = vpop.f32.mrf.mxu0
    %v692 = vadd.f32 %v89, %v691
    %v693 = vpop.f32.mrf.mxu0
    %v694 = vadd.f32 %v93, %v693
    %695 = vmatprep.mubr.bf16.mxu0 0
    %696 = vmatmul.mubr.bf16.gmra.mxu0 %v365
    %v697 = vpop.f32.mrf.mxu0
    %v698 = vadd.f32 %v89, %v697
    %v699 = vpop.f32.mrf.mxu0
    %v700 = vadd.f32 %v93, %v699
    %v701 = vpop.f32.mrf.mxu0
    %v702 = vadd.f32 %v89, %v701
    %v703 = vpop.f32.mrf.mxu0
    %v704 = vadd.f32 %v93, %v703
    %705 = vmatprep.mubr.bf16.mxu0 0
    %706 = vmatmul.mubr.bf16.gmra.mxu0 %v368
    %v707 = vpop.f32.mrf.mxu0
    %v708 = vadd.f32 %v89, %v707
    %v709 = vpop.f32.mrf.mxu0
    %v710 = vadd.f32 %v93, %v709
    %v711 = vpop.f32.mrf.mxu0
    %v712 = vadd.f32 %v89, %v711
    %v713 = vpop.f32.mrf.mxu0
    %v714 = vadd.f32 %v93, %v713
    %715 = vmatprep.mubr.bf16.mxu0 0
    %716 = vmatmul.mubr.bf16.gmra.mxu0 %v371
    %v717 = vpop.f32.mrf.mxu0
    %v718 = vadd.f32 %v89, %v717
    %v719 = vpop.f32.mrf.mxu0
    %v720 = vadd.f32 %v93, %v719
    %v721 = vpop.f32.mrf.mxu0
    %v722 = vadd.f32 %v89, %v721
    %v723 = vpop.f32.mrf.mxu0
    %v724 = vadd.f32 %v93, %v723
    %725 = vdwg.mxu0
    %v726 = vpack.c.bf16 %v412, %v408
    %v727 = vpack.c.bf16 %v414, %v410
    %v728 = vpack.c.bf16 %v422, %v418
    %v729 = vpack.c.bf16 %v424, %v420
    %v730 = vpack.c.bf16 %v432, %v428
    %v731 = vpack.c.bf16 %v434, %v430
    %v732 = vpack.c.bf16 %v442, %v438
    %v733 = vpack.c.bf16 %v444, %v440
    %v734 = vpack.c.bf16 %v452, %v448
    %v735 = vpack.c.bf16 %v454, %v450
    %v736 = vpack.c.bf16 %v462, %v458
    %v737 = vpack.c.bf16 %v464, %v460
    %v738 = vpack.c.bf16 %v472, %v468
    %v739 = vpack.c.bf16 %v474, %v470
    %v740 = vpack.c.bf16 %v482, %v478
    %v741 = vpack.c.bf16 %v484, %v480
    %v742 = vpack.c.bf16 %v492, %v488
    %v743 = vpack.c.bf16 %v494, %v490
    %v744 = vpack.c.bf16 %v502, %v498
    %v745 = vpack.c.bf16 %v504, %v500
    %v746 = vpack.c.bf16 %v512, %v508
    %v747 = vpack.c.bf16 %v514, %v510
    %v748 = vpack.c.bf16 %v522, %v518
    %v749 = vpack.c.bf16 %v524, %v520
    %v750 = vpack.c.bf16 %v532, %v528
    %v751 = vpack.c.bf16 %v534, %v530
    %v752 = vpack.c.bf16 %v542, %v538
    %v753 = vpack.c.bf16 %v544, %v540
    %v754 = vpack.c.bf16 %v552, %v548
    %v755 = vpack.c.bf16 %v554, %v550
    %v756 = vpack.c.bf16 %v562, %v558
    %v757 = vpack.c.bf16 %v564, %v560
    %v758 = vpack.c.bf16 %v572, %v568
    %v759 = vpack.c.bf16 %v574, %v570
    %v760 = vpack.c.bf16 %v582, %v578
    %v761 = vpack.c.bf16 %v584, %v580
    %v762 = vpack.c.bf16 %v592, %v588
    %v763 = vpack.c.bf16 %v594, %v590
    %v764 = vpack.c.bf16 %v602, %v598
    %v765 = vpack.c.bf16 %v604, %v600
    %v766 = vpack.c.bf16 %v612, %v608
    %v767 = vpack.c.bf16 %v614, %v610
    %v768 = vpack.c.bf16 %v622, %v618
    %v769 = vpack.c.bf16 %v624, %v620
    %v770 = vpack.c.bf16 %v632, %v628
    %v771 = vpack.c.bf16 %v634, %v630
    %v772 = vpack.c.bf16 %v642, %v638
    %v773 = vpack.c.bf16 %v644, %v640
    %v774 = vpack.c.bf16 %v652, %v648
    %v775 = vpack.c.bf16 %v654, %v650
    %v776 = vpack.c.bf16 %v662, %v658
    %v777 = vpack.c.bf16 %v664, %v660
    %v778 = vpack.c.bf16 %v672, %v668
    %v779 = vpack.c.bf16 %v674, %v670
    %v780 = vpack.c.bf16 %v682, %v678
    %v781 = vpack.c.bf16 %v684, %v680
    %v782 = vpack.c.bf16 %v692, %v688
    %v783 = vpack.c.bf16 %v694, %v690
    %v784 = vpack.c.bf16 %v702, %v698
    %v785 = vpack.c.bf16 %v704, %v700
    %v786 = vpack.c.bf16 %v712, %v708
    %v787 = vpack.c.bf16 %v714, %v710
    %v788 = vpack.c.bf16 %v722, %v718
    %v789 = vpack.c.bf16 %v724, %v720
    %v854 = vunpack.c.l.b16 %v726
    %v855 = vunpack.c.l.b16 %v727
    %v856 = vunpack.c.h.b16 %v726
    %v857 = vunpack.c.h.b16 %v727
    %v858 = vunpack.c.l.b16 %v728
    %v859 = vunpack.c.l.b16 %v729
    %v860 = vunpack.c.h.b16 %v728
    %v861 = vunpack.c.h.b16 %v729
    %v862 = vunpack.c.l.b16 %v730
    %v863 = vunpack.c.l.b16 %v731
    %v864 = vunpack.c.h.b16 %v730
    %v865 = vunpack.c.h.b16 %v731
    %v866 = vunpack.c.l.b16 %v732
    %v867 = vunpack.c.l.b16 %v733
    %v868 = vunpack.c.h.b16 %v732
    %v869 = vunpack.c.h.b16 %v733
    %v870 = vunpack.c.l.b16 %v734
    %v871 = vunpack.c.l.b16 %v735
    %v872 = vunpack.c.h.b16 %v734
    %v873 = vunpack.c.h.b16 %v735
    %v874 = vunpack.c.l.b16 %v736
    %v875 = vunpack.c.l.b16 %v737
    %v876 = vunpack.c.h.b16 %v736
    %v877 = vunpack.c.h.b16 %v737
    %v878 = vunpack.c.l.b16 %v738
    %v879 = vunpack.c.l.b16 %v739
    %v880 = vunpack.c.h.b16 %v738
    %v881 = vunpack.c.h.b16 %v739
    %v882 = vunpack.c.l.b16 %v740
    %v883 = vunpack.c.l.b16 %v741
    %v884 = vunpack.c.h.b16 %v740
    %v885 = vunpack.c.h.b16 %v741
    %v886 = vunpack.c.l.b16 %v742
    %v887 = vunpack.c.l.b16 %v743
    %v888 = vunpack.c.h.b16 %v742
    %v889 = vunpack.c.h.b16 %v743
    %v890 = vunpack.c.l.b16 %v744
    %v891 = vunpack.c.l.b16 %v745
    %v892 = vunpack.c.h.b16 %v744
    %v893 = vunpack.c.h.b16 %v745
    %v894 = vunpack.c.l.b16 %v746
    %v895 = vunpack.c.l.b16 %v747
    %v896 = vunpack.c.h.b16 %v746
    %v897 = vunpack.c.h.b16 %v747
    %v898 = vunpack.c.l.b16 %v748
    %v899 = vunpack.c.l.b16 %v749
    %v900 = vunpack.c.h.b16 %v748
    %v901 = vunpack.c.h.b16 %v749
    %v902 = vunpack.c.l.b16 %v750
    %v903 = vunpack.c.l.b16 %v751
    %v904 = vunpack.c.h.b16 %v750
    %v905 = vunpack.c.h.b16 %v751
    %v906 = vunpack.c.l.b16 %v752
    %v907 = vunpack.c.l.b16 %v753
    %v908 = vunpack.c.h.b16 %v752
    %v909 = vunpack.c.h.b16 %v753
    %v910 = vunpack.c.l.b16 %v754
    %v911 = vunpack.c.l.b16 %v755
    %v912 = vunpack.c.h.b16 %v754
    %v913 = vunpack.c.h.b16 %v755
    %v914 = vunpack.c.l.b16 %v756
    %v915 = vunpack.c.l.b16 %v757
    %v916 = vunpack.c.h.b16 %v756
    %v917 = vunpack.c.h.b16 %v757
    %v918 = vunpack.c.l.b16 %v758
    %v919 = vunpack.c.l.b16 %v759
    %v920 = vunpack.c.h.b16 %v758
    %v921 = vunpack.c.h.b16 %v759
    %v922 = vunpack.c.l.b16 %v760
    %v923 = vunpack.c.l.b16 %v761
    %v924 = vunpack.c.h.b16 %v760
    %v925 = vunpack.c.h.b16 %v761
    %v926 = vunpack.c.l.b16 %v762
    %v927 = vunpack.c.l.b16 %v763
    %v928 = vunpack.c.h.b16 %v762
    %v929 = vunpack.c.h.b16 %v763
    %v930 = vunpack.c.l.b16 %v764
    %v931 = vunpack.c.l.b16 %v765
    %v932 = vunpack.c.h.b16 %v764
    %v933 = vunpack.c.h.b16 %v765
    %v934 = vunpack.c.l.b16 %v766
    %v935 = vunpack.c.l.b16 %v767
    %v936 = vunpack.c.h.b16 %v766
    %v937 = vunpack.c.h.b16 %v767
    %v938 = vunpack.c.l.b16 %v768
    %v939 = vunpack.c.l.b16 %v769
    %v940 = vunpack.c.h.b16 %v768
    %v941 = vunpack.c.h.b16 %v769
    %v942 = vunpack.c.l.b16 %v770
    %v943 = vunpack.c.l.b16 %v771
    %v944 = vunpack.c.h.b16 %v770
    %v945 = vunpack.c.h.b16 %v771
    %v946 = vunpack.c.l.b16 %v772
    %v947 = vunpack.c.l.b16 %v773
    %v948 = vunpack.c.h.b16 %v772
    %v949 = vunpack.c.h.b16 %v773
    %v950 = vunpack.c.l.b16 %v774
    %v951 = vunpack.c.l.b16 %v775
    %v952 = vunpack.c.h.b16 %v774
    %v953 = vunpack.c.h.b16 %v775
    %v954 = vunpack.c.l.b16 %v776
    %v955 = vunpack.c.l.b16 %v777
    %v956 = vunpack.c.h.b16 %v776
    %v957 = vunpack.c.h.b16 %v777
    %v958 = vunpack.c.l.b16 %v778
    %v959 = vunpack.c.l.b16 %v779
    %v960 = vunpack.c.h.b16 %v778
    %v961 = vunpack.c.h.b16 %v779
    %v962 = vunpack.c.l.b16 %v780
    %v963 = vunpack.c.l.b16 %v781
    %v964 = vunpack.c.h.b16 %v780
    %v965 = vunpack.c.h.b16 %v781
    %v966 = vunpack.c.l.b16 %v782
    %v967 = vunpack.c.l.b16 %v783
    %v968 = vunpack.c.h.b16 %v782
    %v969 = vunpack.c.h.b16 %v783
    %v970 = vunpack.c.l.b16 %v784
    %v971 = vunpack.c.l.b16 %v785
    %v972 = vunpack.c.h.b16 %v784
    %v973 = vunpack.c.h.b16 %v785
    %v974 = vunpack.c.l.b16 %v786
    %v975 = vunpack.c.l.b16 %v787
    %v976 = vunpack.c.h.b16 %v786
    %v977 = vunpack.c.h.b16 %v787
    %v978 = vunpack.c.l.b16 %v788
    %v979 = vunpack.c.l.b16 %v789
    %v980 = vunpack.c.h.b16 %v788
    %v981 = vunpack.c.h.b16 %v789
    %v982 = vpack.c.b16 %v855, %v854
    %v983 = vpack.c.b16 %v857, %v856
    %v984 = vpack.c.b16 %v859, %v858
    %v985 = vpack.c.b16 %v861, %v860
    %v986 = vpack.c.b16 %v863, %v862
    %v987 = vpack.c.b16 %v865, %v864
    %v988 = vpack.c.b16 %v867, %v866
    %v989 = vpack.c.b16 %v869, %v868
    %v990 = vpack.c.b16 %v871, %v870
    %v991 = vpack.c.b16 %v873, %v872
    %v992 = vpack.c.b16 %v875, %v874
    %v993 = vpack.c.b16 %v877, %v876
    %v994 = vpack.c.b16 %v879, %v878
    %v995 = vpack.c.b16 %v881, %v880
    %v996 = vpack.c.b16 %v883, %v882
    %v997 = vpack.c.b16 %v885, %v884
    %v998 = vpack.c.b16 %v887, %v886
    %v999 = vpack.c.b16 %v889, %v888
    %v1000 = vpack.c.b16 %v891, %v890
    %v1001 = vpack.c.b16 %v893, %v892
    %v1002 = vpack.c.b16 %v895, %v894
    %v1003 = vpack.c.b16 %v897, %v896
    %v1004 = vpack.c.b16 %v899, %v898
    %v1005 = vpack.c.b16 %v901, %v900
    %v1006 = vpack.c.b16 %v903, %v902
    %v1007 = vpack.c.b16 %v905, %v904
    %v1008 = vpack.c.b16 %v907, %v906
    %v1009 = vpack.c.b16 %v909, %v908
    %v1010 = vpack.c.b16 %v911, %v910
    %v1011 = vpack.c.b16 %v913, %v912
    %v1012 = vpack.c.b16 %v915, %v914
    %v1013 = vpack.c.b16 %v917, %v916
    %v1014 = vpack.c.b16 %v919, %v918
    %v1015 = vpack.c.b16 %v921, %v920
    %v1016 = vpack.c.b16 %v923, %v922
    %v1017 = vpack.c.b16 %v925, %v924
    %v1018 = vpack.c.b16 %v927, %v926
    %v1019 = vpack.c.b16 %v929, %v928
    %v1020 = vpack.c.b16 %v931, %v930
    %v1021 = vpack.c.b16 %v933, %v932
    %v1022 = vpack.c.b16 %v935, %v934
    %v1023 = vpack.c.b16 %v937, %v936
    %v1024 = vpack.c.b16 %v939, %v938
    %v1025 = vpack.c.b16 %v941, %v940
    %v1026 = vpack.c.b16 %v943, %v942
    %v1027 = vpack.c.b16 %v945, %v944
    %v1028 = vpack.c.b16 %v947, %v946
    %v1029 = vpack.c.b16 %v949, %v948
    %v1030 = vpack.c.b16 %v951, %v950
    %v1031 = vpack.c.b16 %v953, %v952
    %v1032 = vpack.c.b16 %v955, %v954
    %v1033 = vpack.c.b16 %v957, %v956
    %v1034 = vpack.c.b16 %v959, %v958
    %v1035 = vpack.c.b16 %v961, %v960
    %v1036 = vpack.c.b16 %v963, %v962
    %v1037 = vpack.c.b16 %v965, %v964
    %v1038 = vpack.c.b16 %v967, %v966
    %v1039 = vpack.c.b16 %v969, %v968
    %v1040 = vpack.c.b16 %v971, %v970
    %v1041 = vpack.c.b16 %v973, %v972
    %v1042 = vpack.c.b16 %v975, %v974
    %v1043 = vpack.c.b16 %v977, %v976
    %v1044 = vpack.c.b16 %v979, %v978
    %v1045 = vpack.c.b16 %v981, %v980
    %1110 = vst [vmem:[#allocation2] sm:$0xff] %v982
    %1111 = vst [vmem:[#allocation2 + $0x8] sm:$0xff] %v983
    %1112 = vst [vmem:[#allocation2 + $0x10] sm:$0xff] %v984
    %1113 = vst [vmem:[#allocation2 + $0x18] sm:$0xff] %v985
    %1114 = vst [vmem:[#allocation2 + $0x20] sm:$0xff] %v986
    %1115 = vst [vmem:[#allocation2 + $0x28] sm:$0xff] %v987
    %1116 = vst [vmem:[#allocation2 + $0x30] sm:$0xff] %v988
    %1117 = vst [vmem:[#allocation2 + $0x38] sm:$0xff] %v989
    %1118 = vst [vmem:[#allocation2 + $0x40] sm:$0xff] %v990
    %1119 = vst [vmem:[#allocation2 + $0x48] sm:$0xff] %v991
    %1120 = vst [vmem:[#allocation2 + $0x50] sm:$0xff] %v992
    %1121 = vst [vmem:[#allocation2 + $0x58] sm:$0xff] %v993
    %1122 = vst [vmem:[#allocation2 + $0x60] sm:$0xff] %v994
    %1123 = vst [vmem:[#allocation2 + $0x68] sm:$0xff] %v995
    %1124 = vst [vmem:[#allocation2 + $0x70] sm:$0xff] %v996
    %1125 = vst [vmem:[#allocation2 + $0x78] sm:$0xff] %v997
    %1126 = vst [vmem:[#allocation2 + $0x80] sm:$0xff] %v998
    %1127 = vst [vmem:[#allocation2 + $0x88] sm:$0xff] %v999
    %1128 = vst [vmem:[#allocation2 + $0x90] sm:$0xff] %v1000
    %1129 = vst [vmem:[#allocation2 + $0x98] sm:$0xff] %v1001
    %1130 = vst [vmem:[#allocation2 + $0xa0] sm:$0xff] %v1002
    %1131 = vst [vmem:[#allocation2 + $0xa8] sm:$0xff] %v1003
    %1132 = vst [vmem:[#allocation2 + $0xb0] sm:$0xff] %v1004
    %1133 = vst [vmem:[#allocation2 + $0xb8] sm:$0xff] %v1005
    %1134 = vst [vmem:[#allocation2 + $0xc0] sm:$0xff] %v1006
    %1135 = vst [vmem:[#allocation2 + $0xc8] sm:$0xff] %v1007
    %1136 = vst [vmem:[#allocation2 + $0xd0] sm:$0xff] %v1008
    %1137 = vst [vmem:[#allocation2 + $0xd8] sm:$0xff] %v1009
    %1138 = vst [vmem:[#allocation2 + $0xe0] sm:$0xff] %v1010
    %1139 = vst [vmem:[#allocation2 + $0xe8] sm:$0xff] %v1011
    %1140 = vst [vmem:[#allocation2 + $0xf0] sm:$0xff] %v1012
    %1141 = vst [vmem:[#allocation2 + $0xf8] sm:$0xff] %v1013
    %1142 = vst [vmem:[#allocation2 + $0x100] sm:$0xff] %v1014
    %1143 = vst [vmem:[#allocation2 + $0x108] sm:$0xff] %v1015
    %1144 = vst [vmem:[#allocation2 + $0x110] sm:$0xff] %v1016
    %1145 = vst [vmem:[#allocation2 + $0x118] sm:$0xff] %v1017
    %1146 = vst [vmem:[#allocation2 + $0x120] sm:$0xff] %v1018
    %1147 = vst [vmem:[#allocation2 + $0x128] sm:$0xff] %v1019
    %1148 = vst [vmem:[#allocation2 + $0x130] sm:$0xff] %v1020
    %1149 = vst [vmem:[#allocation2 + $0x138] sm:$0xff] %v1021
    %1150 = vst [vmem:[#allocation2 + $0x140] sm:$0xff] %v1022
    %1151 = vst [vmem:[#allocation2 + $0x148] sm:$0xff] %v1023
    %1152 = vst [vmem:[#allocation2 + $0x150] sm:$0xff] %v1024
    %1153 = vst [vmem:[#allocation2 + $0x158] sm:$0xff] %v1025
    %1154 = vst [vmem:[#allocation2 + $0x160] sm:$0xff] %v1026
    %1155 = vst [vmem:[#allocation2 + $0x168] sm:$0xff] %v1027
    %1156 = vst [vmem:[#allocation2 + $0x170] sm:$0xff] %v1028
    %1157 = vst [vmem:[#allocation2 + $0x178] sm:$0xff] %v1029
    %1158 = vst [vmem:[#allocation2 + $0x180] sm:$0xff] %v1030
    %1159 = vst [vmem:[#allocation2 + $0x188] sm:$0xff] %v1031
    %1160 = vst [vmem:[#allocation2 + $0x190] sm:$0xff] %v1032
    %1161 = vst [vmem:[#allocation2 + $0x198] sm:$0xff] %v1033
    %1162 = vst [vmem:[#allocation2 + $0x1a0] sm:$0xff] %v1034
    %1163 = vst [vmem:[#allocation2 + $0x1a8] sm:$0xff] %v1035
    %1164 = vst [vmem:[#allocation2 + $0x1b0] sm:$0xff] %v1036
    %1165 = vst [vmem:[#allocation2 + $0x1b8] sm:$0xff] %v1037
    %1166 = vst [vmem:[#allocation2 + $0x1c0] sm:$0xff] %v1038
    %1167 = vst [vmem:[#allocation2 + $0x1c8] sm:$0xff] %v1039
    %1168 = vst [vmem:[#allocation2 + $0x1d0] sm:$0xff] %v1040
    %1169 = vst [vmem:[#allocation2 + $0x1d8] sm:$0xff] %v1041
    %1170 = vst [vmem:[#allocation2 + $0x1e0] sm:$0xff] %v1042
    %1171 = vst [vmem:[#allocation2 + $0x1e8] sm:$0xff] %v1043
    %1172 = vst [vmem:[#allocation2 + $0x1f0] sm:$0xff] %v1044
    %1173 = vst [vmem:[#allocation2 + $0x1f8] sm:$0xff] %v1045
    // Predicated region
    $region14: #{tpu_custom_call.1} parent=1 // pred_check
      _
    $region15: #{tpu_custom_call.1} parent=1 // pred_check_branch
      %1175 = sbr.rel (0) target = $region17
    $region16: #{tpu_custom_call.1} parent=1 // pred_region
      %s1177 = ssub.s32 8192, 8192
      %1178 = vsyncadd [#allocation3], %s1177
      %s1179 = sshll.u32 [#allocation2], 4
      %s1180 = int_to_ptr.vmem [resolvable:$true] %s1179
      %1185 = dma.vmem_to_hbm [thread:$0]  %s1180, 8192, %s3, [#allocation3], 128, 128, 8
    $region17: #{tpu_custom_call.1} parent=1 // pred_fallthru
      _
    // Predicated region
    $region18: #{tpu_custom_call.1} parent=1 // pred_check
      _
    $region19: #{tpu_custom_call.1} parent=1 // pred_check_branch
      %1187 = sbr.rel (0) target = $region21
    $region20: #{tpu_custom_call.1} parent=1 // pred_region
      %1188 = dma.done [#allocation3], 8192
    $region21: #{tpu_custom_call.1} parent=1 // pred_fallthru
      _
    %1189 = vsyncpa [#allocation3], 1

</llo_original>
